<compile_context>
chip_gen: v7x
topology: tpu7x:2x2x1
jax: 0.10.0
libtpu: 0.0.40
codegen_flags: <defaults>
</compile_context>

<pallas_src>
import functools

import jax
import jax.numpy as jnp
from jax.experimental import pallas as pl
from jax.experimental.pallas import tpu as pltpu


def _round_up(x: int, m: int) -> int:
    return ((x + m - 1) // m) * m


def _tpu_vmem_bytes() -> int:
    """Per-TensorCore VMEM capacity (conservative fallback = 64 MiB)."""
    try:
        info = pltpu.get_tpu_info()
        for attr in ("vmem_capacity_bytes", "vmem_bytes", "vmem_size_bytes"):
            v = getattr(info, attr, None)
            if v:
                return int(v)
    except Exception:
        pass
    try:
        kind = jax.devices()[0].device_kind.lower()
        if "v7" in kind:
            return 64 << 20
        if "v5" in kind or "v6" in kind:
            return 128 << 20
    except Exception:
        pass
    return 64 << 20


def _num_tensorcores() -> int:
    try:
        info = pltpu.get_tpu_info()
        for attr in ("num_cores", "core_count", "num_tensorcores"):
            v = getattr(info, attr, None)
            if v:
                return int(v)
    except Exception:
        pass
    try:
        if "v7" in jax.devices()[0].device_kind.lower():
            return 2
    except Exception:
        pass
    return 1


def _choose_tile_n(n: int, d: int, k: int, budget_bytes: int, tile_cap: int) -> int:
    """Largest row tile (<= tile_cap, multiple of 8) whose VMEM footprint fits.

    VMEM occupancy uses lane/sublane-padded extents (blocks are laid out in
    (8,128) tiles in VMEM even though the HBM DMA only moves real elements).
    """
    d_v = _round_up(d, 128)
    k_v = _round_up(k, 128)
    tile = min(tile_cap, _round_up(max(n, 1), 8))
    while tile > 8:
        need = 4 * (2 * tile * d_v          # x tile, double-buffered
                    + 1 * k_v * d_v         # centers^T, single-buffered
                    + 2 * tile * k_v        # output tile, double-buffered
                    + 8 * k_v)              # ||c||^2 row
        if need <= budget_bytes:
            break
        tile = _round_up(tile // 2, 8)
    return max(tile, 8)


def _cluster_assign_kernel(x_ref, ct_ref, c2_ref, o_ref, *,
                           inv_alpha: float, power: float):
    # x_ref : (TN, D)  row tile of inputs (unpadded D, full-extent last dim)
    # ct_ref: (D,  K)  cluster centers, pre-transposed, VMEM-resident
    # c2_ref: (1,  K)  precomputed ||c_k||^2
    # o_ref : (TN, K)  soft assignments (unpadded K)
    x = x_ref[...].astype(jnp.float32)
    ct = ct_ref[...].astype(jnp.float32)
    c2 = c2_ref[...].astype(jnp.float32)

    # ||x_n||^2 per row (XLU reduce) and x . c^T on the MXU (standard (1,0)
    # contraction, no per-step transpose of the resident centers).
    x2 = jnp.sum(x * x, axis=1, keepdims=True)                   # (TN, 1)
    xc = jnp.dot(x, ct, preferred_element_type=jnp.float32)      # (TN, K)

    # Gram identity; clamp tiny negatives from cancellation.
    norm_sq = jnp.maximum(x2 + c2 - 2.0 * xc, 0.0)               # (TN, K)

    # Student-t numerator via EUP reciprocal + one Newton step (~exact f32).
    t = 1.0 + norm_sq * inv_alpha
    num = pl.reciprocal(t, approx=True)
    num = num * (2.0 - t * num)
    if power != 1.0:                                             # trace-time guard
        num = num ** power

    # Row normalization (EUP reciprocal + Newton step).
    denom = jnp.sum(num, axis=1, keepdims=True)                  # (TN, 1)
    inv = pl.reciprocal(denom, approx=True)
    inv = inv * (2.0 - denom * inv)
    o_ref[...] = (num * inv).astype(o_ref.dtype)


def cluster_assignment(x, cluster_centers, alpha: float, *, tile_n: int | None = None):
    """Pallas implementation of ClusterAssignment.forward.

    x:               (N, D) float32
    cluster_centers: (K, D) float32
    returns:         (N, K) float32 soft assignments (rows sum to 1)
    """
    N, D = x.shape
    K, D2 = cluster_centers.shape
    assert D == D2, "embedding dimension mismatch"

    x = x.astype(jnp.float32)
    # One-time XLA transpose of the tiny parameter; avoids a per-grid-step
    # XLU transpose of the resident centers inside the kernel.
    c_t = jnp.transpose(cluster_centers.astype(jnp.float32))     # (D, K)
    c2 = jnp.sum(c_t * c_t, axis=0, keepdims=True)               # (1, K)

    # Generation-aware VMEM budgeting.
    vmem_cap = _tpu_vmem_bytes()
    budget = max(vmem_cap - (24 << 20), 16 << 20)        # ~40 MiB v7x, ~104 MiB v5e/v6e
    tile_cap = 2048 if vmem_cap >= (96 << 20) else 1024

    if tile_n is None:
        tile_n = _choose_tile_n(N, D, K, budget - (8 << 20), tile_cap)
    tile_n = max(8, _round_up(tile_n, 8))

    grid_n = pl.cdiv(N, tile_n)

    # Dual-TensorCore chips (v7x): keep the step count even so the "parallel"
    # axis splits evenly across both cores; never shrink tiles below 512 rows,
    # and never shrink at all on single-TC chips (v5e/v6e).
    if _num_tensorcores() >= 2:
        if grid_n == 1 and N >= 1024:
            tile_n = _round_up(pl.cdiv(N, 2), 8)
        elif grid_n > 1 and grid_n % 2 == 1:
            tile_new = _round_up(pl.cdiv(N, grid_n + 1), 8)
            if tile_new >= 512:
                tile_n = tile_new
        grid_n = pl.cdiv(N, tile_n)

    d_v = _round_up(D, 128)
    k_v = _round_up(K, 128)
    vmem_need = 4 * (2 * tile_n * d_v + k_v * d_v + 2 * tile_n * k_v + 8 * k_v)
    vmem_limit = int(min(max(vmem_need + (8 << 20), 16 << 20), budget))

    kernel = functools.partial(
        _cluster_assign_kernel,
        inv_alpha=1.0 / float(alpha),
        power=float(alpha + 1.0) / 2.0,
    )

    out = pl.pallas_call(
        kernel,
        out_shape=jax.ShapeDtypeStruct((N, K), jnp.float32),
        grid_spec=pltpu.PrefetchScalarGridSpec(
            num_scalar_prefetch=0,
            grid=(grid_n,),
            in_specs=[
                # x row tile: unpadded D (full-extent last dim), grid-clipped in N.
                pl.BlockSpec((tile_n, D), lambda i: (i, 0)),
                # Resident centers^T and ||c||^2: constant index_map, so a
                # single VMEM buffer suffices (never re-fetched).
                pl.BlockSpec((D, K), lambda i: (0, 0),
                             pipeline_mode=pl.Buffered(1)),
                pl.BlockSpec((1, K), lambda i: (0, 0),
                             pipeline_mode=pl.Buffered(1)),
            ],
            out_specs=pl.BlockSpec((tile_n, K), lambda i: (i, 0)),
        ),
        compiler_params=pltpu.CompilerParams(
            dimension_semantics=("parallel",),
            vmem_limit_bytes=vmem_limit,
        ),
    )(x, c_t, c2)

    return out


def _xavier_uniform(key, shape):
    # nn.init.xavier_uniform_ on a (K, D) matrix: bound = sqrt(6 / (K + D))
    fan_out, fan_in = shape
    bound = jnp.sqrt(6.0 / (fan_in + fan_out))
    return jax.random.uniform(key, shape, dtype=jnp.float32,
                              minval=-bound, maxval=bound)


def _reference(x, centers, alpha):
    # Pure-JAX reference mirroring the PyTorch forward exactly.
    norm_squared = jnp.sum((x[:, None, :] - centers[None, :, :]) ** 2, axis=2)
    numerator = 1.0 / (1.0 + norm_squared / alpha)
    power = float(alpha + 1.0) / 2.0
    numerator = numerator ** power
    return numerator / jnp.sum(numerator, axis=1, keepdims=True)


if __name__ == "__main__":
    key = jax.random.PRNGKey(0)
    k_x, k_c = jax.random.split(key)

    N, D, K = 16, 32, 8        # batch, embedding_dimension, cluster_number
    alpha = 1.0

    x = jax.random.normal(k_x, (N, D), dtype=jnp.float32)
    cluster_centers = _xavier_uniform(k_c, (K, D))   # deterministic "parameter"

    out = cluster_assignment(x, cluster_centers, alpha)
    out = jax.block_until_ready(out)

    ref = _reference(x, cluster_centers, alpha)
    assert out.shape == (N, K)
    assert jnp.allclose(out, ref, atol=1e-5, rtol=1e-5), "mismatch vs reference"
    # Rows should sum to 1.
    assert jnp.allclose(jnp.sum(out, axis=1), jnp.ones((N,)), atol=1e-5)

    print("KERNEL_OK")
</pallas_src>

<mosaic_0001>
module attributes {stable_mosaic.version = 11 : i64} {
  func.func @_cluster_assign_kernel(%arg0: i32, %arg1: memref<16x32xf32, #tpu.memory_space<vmem>>, %arg2: memref<32x8xf32, #tpu.memory_space<vmem>>, %arg3: memref<1x8xf32, #tpu.memory_space<vmem>>, %arg4: memref<16x8xf32, #tpu.memory_space<vmem>>) attributes {dimension_semantics = [#tpu.dimension_semantics<parallel>], iteration_bounds = array<i64: 1>, scalar_prefetch = 0 : i64, scratch_operands = 0 : i64, tpu.core_type = #tpu.core_type<tc>, window_params = [{transform_indices = @transform_0, window_bounds = array<i64: 16, 32>}, {pipeline_mode = #tpu.pipeline_mode<synchronous>, transform_indices = @transform_1, window_bounds = array<i64: 32, 8>}, {pipeline_mode = #tpu.pipeline_mode<synchronous>, transform_indices = @transform_2, window_bounds = array<i64: 1, 8>}, {transform_indices = @transform_3, window_bounds = array<i64: 16, 8>}]} {
    %c0 = arith.constant 0 : index
    %c0_0 = arith.constant 0 : index
    %0 = vector.load %arg1[%c0, %c0_0] : memref<16x32xf32, #tpu.memory_space<vmem>>, vector<16x32xf32>
    %c0_1 = arith.constant 0 : index
    %c0_2 = arith.constant 0 : index
    %1 = vector.load %arg2[%c0_1, %c0_2] : memref<32x8xf32, #tpu.memory_space<vmem>>, vector<32x8xf32>
    %c0_3 = arith.constant 0 : index
    %c0_4 = arith.constant 0 : index
    %2 = vector.load %arg3[%c0_3, %c0_4] : memref<1x8xf32, #tpu.memory_space<vmem>>, vector<1x8xf32>
    %3 = arith.mulf %0, %0 : vector<16x32xf32>
    %cst = arith.constant dense<0.000000e+00> : vector<16xf32>
    %4 = vector.multi_reduction <add>, %3, %cst [1] : vector<16x32xf32> to vector<16xf32>
    %5 = vector.shape_cast %4 : vector<16xf32> to vector<16x1xf32>
    %cst_5 = arith.constant dense<0.000000e+00> : vector<16x8xf32>
    %6 = tpu.matmul %0, %1, %cst_5 {dimension_numbers = #tpu.dot_dimension_numbers<[1], [0], [0], [1], [0, 0, 1, 1], [], []>} : vector<16x32xf32>, vector<32x8xf32>, vector<16x8xf32> -> vector<16x8xf32>
    %7 = vector.broadcast %5 : vector<16x1xf32> to vector<16x8xf32>
    %8 = vector.broadcast %2 : vector<1x8xf32> to vector<16x8xf32>
    %9 = arith.addf %7, %8 : vector<16x8xf32>
    %cst_6 = arith.constant 2.000000e+00 : f32
    %10 = vector.broadcast %cst_6 : f32 to vector<16x8xf32>
    %11 = arith.mulf %10, %6 : vector<16x8xf32>
    %12 = arith.subf %9, %11 : vector<16x8xf32>
    %cst_7 = arith.constant 0.000000e+00 : f32
    %13 = vector.broadcast %cst_7 : f32 to vector<16x8xf32>
    %14 = arith.maximumf %12, %13 : vector<16x8xf32>
    %cst_8 = arith.constant 1.000000e+00 : f32
    %15 = vector.broadcast %cst_8 : f32 to vector<16x8xf32>
    %16 = arith.mulf %14, %15 : vector<16x8xf32>
    %cst_9 = arith.constant 1.000000e+00 : f32
    %17 = vector.broadcast %cst_9 : f32 to vector<16x8xf32>
    %18 = arith.addf %17, %16 : vector<16x8xf32>
    %19 = tpu.reciprocal %18 {approx = true} : vector<16x8xf32> -> vector<16x8xf32>
    %20 = arith.mulf %18, %19 : vector<16x8xf32>
    %cst_10 = arith.constant 2.000000e+00 : f32
    %21 = vector.broadcast %cst_10 : f32 to vector<16x8xf32>
    %22 = arith.subf %21, %20 : vector<16x8xf32>
    %23 = arith.mulf %19, %22 : vector<16x8xf32>
    %cst_11 = arith.constant dense<0.000000e+00> : vector<16xf32>
    %24 = vector.multi_reduction <add>, %23, %cst_11 [1] : vector<16x8xf32> to vector<16xf32>
    %25 = vector.shape_cast %24 : vector<16xf32> to vector<16x1xf32>
    %26 = tpu.reciprocal %25 {approx = true} : vector<16x1xf32> -> vector<16x1xf32>
    %27 = arith.mulf %25, %26 : vector<16x1xf32>
    %cst_12 = arith.constant 2.000000e+00 : f32
    %28 = vector.broadcast %cst_12 : f32 to vector<16x1xf32>
    %29 = arith.subf %28, %27 : vector<16x1xf32>
    %30 = arith.mulf %26, %29 : vector<16x1xf32>
    %31 = vector.broadcast %30 : vector<16x1xf32> to vector<16x8xf32>
    %32 = arith.mulf %23, %31 : vector<16x8xf32>
    %c0_13 = arith.constant 0 : index
    %c0_14 = arith.constant 0 : index
    %33 = vector.load %arg4[%c0_13, %c0_14] : memref<16x8xf32, #tpu.memory_space<vmem>>, vector<16x8xf32>
    tpu.vector_store %arg4[%c0_13, %c0_14], %32 {strides = array<i32>} : memref<16x8xf32, #tpu.memory_space<vmem>>, vector<16x8xf32>,
    return
  }
  func.func @transform_0(%arg0: i32) -> (i32, i32) {
    %c0_i32 = arith.constant 0 : i32
    %c0_i32_0 = arith.constant 0 : i32
    return %arg0, %c0_i32 : i32, i32
  }
  func.func @transform_1(%arg0: i32) -> (i32, i32) {
    %c0_i32 = arith.constant 0 : i32
    %c0_i32_0 = arith.constant 0 : i32
    %c0_i32_1 = arith.constant 0 : i32
    return %c0_i32, %c0_i32_0 : i32, i32
  }
  func.func @transform_2(%arg0: i32) -> (i32, i32) {
    %c0_i32 = arith.constant 0 : i32
    %c0_i32_0 = arith.constant 0 : i32
    %c0_i32_1 = arith.constant 0 : i32
    return %c0_i32, %c0_i32_0 : i32, i32
  }
  func.func @transform_3(%arg0: i32) -> (i32, i32) {
    %c0_i32 = arith.constant 0 : i32
    %c0_i32_0 = arith.constant 0 : i32
    return %arg0, %c0_i32 : i32, i32
  }
}

</mosaic_0001>

<llo_original>
// kernel: tpu_custom_call.1
$region0: #{tpu_custom_call.1}
  #allocation0 [shape = 'u32[]', space=smem, size = 0x4, offset = 0x4, fixed_abs, tag = 'smem constant byte address 0x4 - core index']
  #allocation1 [shape = 'u32[144,128]{1,0:T(1,128)}', space=vmem, size = 0x12000, scoped, tag = 'internal scratch']
  %s0 = inlined_call_operand.vmem [shape: f32[16,32], index: 0, kind: input, shape index: {}]
  %s1 = inlined_call_operand.vmem [shape: f32[32,8], index: 1, kind: input, shape index: {}]
  %s2 = inlined_call_operand.vmem [shape: f32[1,8], index: 2, kind: input, shape index: {}]
  %s3 = inlined_call_operand.vmem [shape: f32[16,8], index: 3, kind: output, shape index: {}]
  %s4 = sld [smem:[#allocation0]]
  $region22: #{tpu_custom_call.1} parent=0
    _
  %s6 = ssub.s32 1, %s4
  %s7 = scalar_select 0, %s6, %s4
  // Predicated region
  $region2: #{tpu_custom_call.1} parent=0 // pred_check
    _
  $region3: #{tpu_custom_call.1} parent=0 // pred_check_branch
    %9 = sbr.rel (0) target = $region5
  $region4: #{tpu_custom_call.1} parent=0 // pred_region
    _
  $region5: #{tpu_custom_call.1} parent=0 // pred_fallthru
    _
  // Predicated region
  $region6: #{tpu_custom_call.1} parent=0 // pred_check
    _
  $region7: #{tpu_custom_call.1} parent=0 // pred_check_branch
    %11 = sbr.rel (0) target = $region9
  $region8: #{tpu_custom_call.1} parent=0 // pred_region
    _
  $region9: #{tpu_custom_call.1} parent=0 // pred_fallthru
    _
  // Predicated region
  $region10: #{tpu_custom_call.1} parent=0 // pred_check
    _
  $region11: #{tpu_custom_call.1} parent=0 // pred_check_branch
    %13 = sbr.rel (0) target = $region13
  $region12: #{tpu_custom_call.1} parent=0 // pred_region
    _
  $region13: #{tpu_custom_call.1} parent=0 // pred_fallthru
    _
  %v14 = vld [vmem:[%s0] sm:$0xff]
  %v15 = vld [vmem:[%s0 + $0x8] sm:$0xff]
  %v16 = vld [vmem:[%s1] sm:$0xff]
  %v17 = vld [vmem:[%s1 + $0x8] sm:$0xff]
  %v18 = vld [vmem:[%s1 + $0x10] sm:$0xff]
  %v19 = vld [vmem:[%s1 + $0x18] sm:$0xff]
  %v20 = vld [vmem:[%s2] sm:$0x1]
  %v21 = vmul.f32 %v14, %v14
  %v22 = vmul.f32 %v15, %v15
  %vm23 = vcmask 261120
  %v24 = vsel %vm23, %v21, 0.0
  %25 = vadd.xlane.f32.xlu0 %v24
  %v26 = vpop.xlane.xlu0 %25
  %v27 = vsel %vm23, %v22, 0.0
  %28 = vadd.xlane.f32.xlu0 %v27
  %v29 = vpop.xlane.xlu0 %28
  %v31 = vsel %vm23, %v14, 0
  %v34 = vsel %vm23, %v15, 0
  %36 = vmatprep.subr.mxu0 0.0
  %37 = vmatpush1.msra.mxu0 %v16
  %38 = vmatprep.subr.mxu0 0.0
  %39 = vmatpush1.msra.mxu0 %v17
  %40 = vmatprep.subr.mxu0 0.0
  %41 = vmatpush1.msra.mxu0 %v18
  %42 = vmatprep.subr.mxu0 0.0
  %43 = vmatpush1.msra.mxu0 %v19
  %44 = vmatprep.subr.mxu0 0.0
  %45 = vmatpush1.msra.mxu0 0.0
  %46 = vmatprep.subr.mxu0 0.0
  %47 = vmatpush1.msra.mxu0 0.0
  %48 = vmatprep.subr.mxu0 0.0
  %49 = vmatpush1.msra.mxu0 0.0
  %50 = vmatprep.subr.mxu0 0.0
  %51 = vmatpush1.msra.mxu0 0.0
  %52 = vmatprep.subr.mxu0 0.0
  %53 = vmatpush1.msra.mxu0 0.0
  %54 = vmatprep.subr.mxu0 0.0
  %55 = vmatpush1.msra.mxu0 0.0
  %56 = vmatprep.subr.mxu0 0.0
  %57 = vmatpush1.msra.mxu0 0.0
  %58 = vmatprep.subr.mxu0 0.0
  %59 = vmatpush1.msra.mxu0 0.0
  %60 = vmatprep.subr.mxu0 0.0
  %61 = vmatpush1.msra.mxu0 0.0
  %62 = vmatprep.subr.mxu0 0.0
  %63 = vmatpush1.msra.mxu0 0.0
  %64 = vmatprep.subr.mxu0 0.0
  %65 = vmatpush1.msra.mxu0 0.0
  %66 = vmatprep.subr.mxu0 0.0
  %67 = vmatpush1.msra.mxu0 0.0
  %68 = vmatprep.subr.mxu0 0.0
  %69 = vmatpush1.msra.mxu0 0.0
  %70 = vmatprep.subr.mxu0 0.0
  %71 = vmatpush1.msra.mxu0 0.0
  %72 = vmatprep.subr.mxu0 0.0
  %73 = vmatpush1.msra.mxu0 0.0
  %74 = vmatprep.subr.mxu0 0.0
  %75 = vmatpush1.msra.mxu0 0.0
  %76 = vmatprep.subr.mxu0 0.0
  %77 = vmatpush1.msra.mxu0 0.0
  %78 = vmatprep.subr.mxu0 0.0
  %79 = vmatpush1.msra.mxu0 0.0
  %80 = vmatprep.subr.mxu0 0.0
  %81 = vmatpush1.msra.mxu0 0.0
  %82 = vmatprep.subr.mxu0 0.0
  %83 = vmatpush1.msra.mxu0 0.0
  %84 = vmatprep.subr.mxu0 0.0
  %85 = vmatpush1.msra.mxu0 0.0
  %86 = vmatprep.subr.mxu0 0.0
  %87 = vmatpush1.msra.mxu0 0.0
  %88 = vmatprep.subr.mxu0 0.0
  %89 = vmatpush1.msra.mxu0 0.0
  %90 = vmatprep.subr.mxu0 0.0
  %91 = vmatpush1.msra.mxu0 0.0
  %92 = vmatprep.subr.mxu0 0.0
  %93 = vmatpush1.msra.mxu0 0.0
  %94 = vmatprep.subr.mxu0 0.0
  %95 = vmatpush1.msra.mxu0 0.0
  %96 = vmatprep.subr.mxu0 0.0
  %97 = vmatpush1.msra.mxu0 0.0
  %98 = vmatprep.subr.mxu0 0.0
  %99 = vmatpush1.msra.mxu0 0.0
  %100 = vmatprep.mubr.f32.mxu0 0.0
  %101 = vmatmul.mubr.f32.gmra.mrb[0].mxu0 %v31
  %v102 = vpop.f32.mrb[0].mxu0
  %v103 = vadd.f32 0.0, %v102
  %v104 = vpop.f32.mrb[0].mxu0
  %105 = vmatprep.mubr.f32.mxu0 0.0
  %106 = vmatmul.mubr.f32.gmra.mrb[0].mxu0 %v34
  %v107 = vpop.f32.mrb[0].mxu0
  %v108 = vadd.f32 0.0, %v107
  %v109 = vpop.f32.mrb[0].mxu0
  %110 = vdwg.mxu0
  %v112 = vlaneseq
  %v113 = vshrl.u32 %v112, 7
  %v114 = vsub.s32 0, %v113
  %v115 = vrot.slane %v20, %v114
  %v117 = vadd.f32 %v26, %v115
  %v118 = vadd.f32 %v29, %v115
  %v119 = vmul.f32 %v103, 2.0
  %v120 = vmul.f32 %v108, 2.0
  %v121 = vsub.f32 %v117, %v119
  %v122 = vsub.f32 %v118, %v120
  %v123 = vmax.f32 %v121, 0.0
  %v124 = vmax.f32 %v122, 0.0
  %v125 = vadd.f32 %v123, 1.0
  %v126 = vadd.f32 %v124, 1.0
  %v127 = vrcp.pop %v125
  %v128 = vrcp.pop %v126
  %v129 = vmul.f32 %v125, %v127
  %v130 = vmul.f32 %v126, %v128
  %v131 = vsub.f32 2.0, %v129
  %v132 = vsub.f32 2.0, %v130
  %v133 = vmul.f32 %v127, %v131
  %v134 = vmul.f32 %v128, %v132
  %vm135 = vcmask 64512
  %v136 = vsel %vm135, %v133, 0.0
  %137 = vadd.xlane.f32.xlu0 %v136
  %v138 = vpop.xlane.xlu0 %137
  %v139 = vsel %vm135, %v134, 0.0
  %140 = vadd.xlane.f32.xlu0 %v139
  %v141 = vpop.xlane.xlu0 %140
  %v142 = vrcp.pop %v138
  %v143 = vrcp.pop %v141
  %v144 = vmul.f32 %v138, %v142
  %v145 = vmul.f32 %v141, %v143
  %v146 = vsub.f32 2.0, %v144
  %v147 = vsub.f32 2.0, %v145
  %v148 = vmul.f32 %v142, %v146
  %v149 = vmul.f32 %v143, %v147
  %v150 = vmul.f32 %v133, %v148
  %v151 = vmul.f32 %v134, %v149
  %152 = vst.msk [vmem:[%s3] sm:$0xff] %vm135, %v150
  %153 = vst.msk [vmem:[%s3 + $0x8] sm:$0xff] %vm135, %v151
  // Predicated region
  $region14: #{tpu_custom_call.1} parent=0 // pred_check
    _
  $region15: #{tpu_custom_call.1} parent=0 // pred_check_branch
    %155 = sbr.rel (0) target = $region17
  $region16: #{tpu_custom_call.1} parent=0 // pred_region
    _
  $region17: #{tpu_custom_call.1} parent=0 // pred_fallthru
    _
  // Predicated region
  $region18: #{tpu_custom_call.1} parent=0 // pred_check
    _
  $region19: #{tpu_custom_call.1} parent=0 // pred_check_branch
    %157 = sbr.rel (0) target = $region21
  $region20: #{tpu_custom_call.1} parent=0 // pred_region
    _
  $region21: #{tpu_custom_call.1} parent=0 // pred_fallthru
    _

</llo_original>
